<compile_context>
chip_gen: v7x
topology: tpu7x:2x2x1
jax: 0.10.0
libtpu: 0.0.40
codegen_flags: <defaults>
</compile_context>

<pallas_src>
import math
import numpy as np
import jax
import jax.numpy as jnp
from jax.experimental import pallas as pl
from jax.experimental.pallas import tpu as pltpu


def _round_up(x, m):
    return ((x + m - 1) // m) * m


# ----------------------------------------------------------------------------
# STFT analysis basis (numpy, mirrors init_kernel from the PyTorch module)
# ----------------------------------------------------------------------------
def init_kernel_matrix(frame_len, frame_hop, num_fft):
    """Returns K of shape (frame_len, fft_size + 2) such that
       conv1d(x, K_torch)[n, c, t] == (frames @ K)[n, t, c]."""
    fft_size = 2 ** math.ceil(math.log2(frame_len)) if not num_fft else num_fft
    assert frame_len == fft_size, "original code's window broadcast needs frame_len == fft_size"
    n = np.arange(frame_len, dtype=np.float64)
    # torch.hann_window (periodic) ** 0.5
    window = np.sqrt(0.5 * (1.0 - np.cos(2.0 * np.pi * n / frame_len)))
    S_ = 0.5 * (fft_size * fft_size / frame_hop) ** 0.5
    w = np.fft.rfft(np.eye(fft_size) / S_, axis=-1)          # (fft, F) complex
    k_mat = np.concatenate([w.real, w.imag], axis=1)          # (fft, 2F)
    return (k_mat * window[:, None]).astype(np.float32)


def build_band(k_mat, frame_hop, frames_per_chunk):
    """Chunk-local banded kernel: band[t*hop + l, c*Tc + t] = k_mat[l, c].
    Columns are (channel-major, time-minor) so the per-chunk matmul result
    reshapes straight to (rows, C, Tc) with no transpose."""
    L, C = k_mat.shape
    Tc = frames_per_chunk
    Lc = L + (Tc - 1) * frame_hop
    Lc_pad = _round_up(Lc, 128)                 # lane-aligned contraction depth
    CB = _round_up(C * Tc, 128)                 # lane-dense output columns
    band = np.zeros((Lc_pad, CB), np.float32)
    cols = np.arange(C) * Tc
    for t in range(Tc):
        band[t * frame_hop: t * frame_hop + L, cols + t] = k_mat
    return band, Lc, Lc_pad, CB


# ----------------------------------------------------------------------------
# Pallas kernel: one lane-dense MXU matmul per (row-block, time-chunk) step
# ----------------------------------------------------------------------------
def _stft_chunk_kernel(sig_ref, band_ref, out_ref):
    # sig_ref: (1, BN, Lc_pad), band_ref: (Lc_pad, CB), out_ref: (1, BN, CB)
    out_ref[0] = jnp.dot(sig_ref[0], band_ref[...],
                         preferred_element_type=jnp.float32)


def stft_conv_pallas(sig, band, *, frame_len, frame_hop, frames_per_chunk,
                     lc_pad, num_channels, compute_dtype):
    """sig: (N, S) float32 -> (N, 2F, T) float32 via the chunked banded matmul."""
    N, S = sig.shape
    L, hop, Tc, C = frame_len, frame_hop, frames_per_chunk, num_channels
    CB = band.shape[1]
    T = (S - L) // hop + 1
    n_chunks = -(-T // Tc)                          # cdiv

    # Row blocking: one big block feeds the MXU M dim (not 8-row slivers).
    BN = min(_round_up(N, 8), 256)
    N_pad = _round_up(N, BN)

    # Zero-pad the signal so every chunk window of lc_pad samples is in-bounds
    # (frames past T land on zeros and are dropped below).
    S_need = (n_chunks - 1) * Tc * hop + lc_pad
    S_pad = max(S, S_need)
    sig_p = jnp.zeros((N_pad, S_pad), compute_dtype).at[:N, :S].set(
        sig.astype(compute_dtype))

    # Gather overlapping chunk windows -> (n_chunks, N_pad, lc_pad).
    idx = (jnp.arange(n_chunks) * (Tc * hop))[:, None] + jnp.arange(lc_pad)[None, :]
    sig_chunks = jnp.transpose(sig_p[:, idx], (1, 0, 2))

    out = pl.pallas_call(
        _stft_chunk_kernel,
        out_shape=jax.ShapeDtypeStruct((n_chunks, N_pad, CB), jnp.float32),
        grid=(N_pad // BN, n_chunks),
        in_specs=[
            # Signal chunks stream through the pipeline.
            pl.BlockSpec((1, BN, lc_pad), lambda i, j: (j, i, 0)),
            # The band is chunk-invariant (constant index map): fetched once.
            pl.BlockSpec((lc_pad, CB), lambda i, j: (0, 0)),
        ],
        out_specs=pl.BlockSpec((1, BN, CB), lambda i, j: (j, i, 0)),
        compiler_params=pltpu.CompilerParams(
            dimension_semantics=("parallel", "parallel"),
            vmem_limit_bytes=32 * 1024 * 1024,      # explicit; blocks ~1.5 MiB
        ),
    )(sig_chunks, band)

    # (n_chunks, N, C, Tc) -> (N, C, T); pure reshape when n_chunks == 1.
    out = out[:, :N, :C * Tc].reshape(n_chunks, N, C, Tc)
    out = jnp.transpose(out, (1, 2, 0, 3)).reshape(N, C, n_chunks * Tc)
    return out[:, :, :T]


# ----------------------------------------------------------------------------
# MultiChannelSTFT forward wrapper
# ----------------------------------------------------------------------------
class MultiChannelSTFTPallas:
    def __init__(self, num_fft=32, frame_len=32, frame_hop=16,
                 compute_dtype=jnp.float32, target_depth=256):
        self.frame_len = frame_len
        self.frame_hop = frame_hop
        self.num_bins = num_fft // 2 + 1
        self.compute_dtype = compute_dtype
        k_np = init_kernel_matrix(frame_len, frame_hop, num_fft)   # (L, 2F)
        self.num_channels = k_np.shape[1]
        # Frames per chunk sized so the contraction depth Lc ~= target_depth
        # (256 matches v6e/v7x 256-deep MXUs; pass target_depth=128 on v5e).
        self.frames_per_chunk = max(
            1, (max(target_depth, frame_len) - frame_len) // frame_hop + 1)
        band, self.Lc, self.Lc_pad, self.CB = build_band(
            k_np, frame_hop, self.frames_per_chunk)
        self.band = jnp.asarray(band, dtype=compute_dtype)          # cached once
        self.k_mat_f32 = jnp.asarray(k_np)                          # reference path
        # TODO(synk): unused by forward (kept for parity with the PyTorch module)
        self.mic_position = np.array(
            [[0.13, 0], [0.11, 0], [0.09, 0], [0.07, 0],
             [-0.07, 0], [-0.09, 0], [-0.11, 0], [-0.13, 0]], dtype=np.float32)
        self.n_mic = self.mic_position.shape[0]

    def __call__(self, x, echo=None):
        if echo is None:            # PyTorch-style forward(all) with all = (x, echo)
            x, echo = x[0], x[1]
        B, M, S = x.shape
        F_ = self.num_bins
        sig = jnp.concatenate([x.reshape(B * M, S), echo.reshape(B, S)], axis=0)
        out = stft_conv_pallas(
            sig, self.band,
            frame_len=self.frame_len, frame_hop=self.frame_hop,
            frames_per_chunk=self.frames_per_chunk,
            lc_pad=self.Lc_pad, num_channels=self.num_channels,
            compute_dtype=self.compute_dtype)                       # (N, 2F, T)
        T = out.shape[-1]
        r, i = out[:, :F_, :], out[:, F_:, :]
        real = r[:B * M].reshape(B, M, F_, T)
        imag = i[:B * M].reshape(B, M, F_, T)
        real_echo = r[B * M:].reshape(B, 1, F_, T)
        imag_echo = i[B * M:].reshape(B, 1, F_, T)
        return real, imag, real_echo, imag_echo


# Pure-JAX reference (same math, no Pallas) for a correctness check.
def _ref_forward(model, x, echo):
    B, M, S = x.shape
    F_ = model.num_bins
    sig = jnp.concatenate([x.reshape(B * M, S), echo.reshape(B, S)], axis=0)
    L, hop = model.frame_len, model.frame_hop
    T = (S - L) // hop + 1
    frames = jnp.stack([sig[:, t * hop: t * hop + L] for t in range(T)], axis=1)
    out = jnp.einsum("ntl,lc->ntc", frames, model.k_mat_f32,
                     precision=jax.lax.Precision.HIGHEST)
    out = jnp.transpose(out, (0, 2, 1))
    r, i = out[:, :F_, :], out[:, F_:, :]
    return (r[:B * M].reshape(B, M, F_, T), i[:B * M].reshape(B, M, F_, T),
            r[B * M:].reshape(B, 1, F_, T), i[B * M:].reshape(B, 1, F_, T))


if __name__ == "__main__":
    B, M, S = 2, 4, 128
    num_fft = frame_len = 32
    frame_hop = 16

    key = jax.random.PRNGKey(0)
    kx, ke = jax.random.split(key)
    x = jax.random.normal(kx, (B, M, S), dtype=jnp.float32)
    echo = jax.random.normal(ke, (B, S), dtype=jnp.float32)

    F_ = num_fft // 2 + 1
    T = (S - frame_len) // frame_hop + 1

    # f32 default: STFT-grade parity with the PyTorch reference.
    model_f32 = MultiChannelSTFTPallas(num_fft=num_fft, frame_len=frame_len,
                                       frame_hop=frame_hop,
                                       compute_dtype=jnp.float32)
    outs_f32 = model_f32(x, echo)
    jax.block_until_ready(outs_f32)

    # bf16 inputs / f32 accumulation: the MXU-throughput path.
    model_bf16 = MultiChannelSTFTPallas(num_fft=num_fft, frame_len=frame_len,
                                        frame_hop=frame_hop,
                                        compute_dtype=jnp.bfloat16)
    outs_bf16 = model_bf16(x, echo)
    jax.block_until_ready(outs_bf16)

    for real, imag, real_echo, imag_echo in (outs_f32, outs_bf16):
        assert real.shape == (B, M, F_, T) and imag.shape == (B, M, F_, T)
        assert real_echo.shape == (B, 1, F_, T) and imag_echo.shape == (B, 1, F_, T)

    refs = _ref_forward(model_f32, x, echo)
    for a, b in zip(outs_f32, refs):
        assert jnp.allclose(a, b, atol=2e-3, rtol=2e-3)
    for a, b in zip(outs_bf16, refs):   # bf16 inputs -> loosened tolerance
        assert jnp.allclose(a, b, atol=5e-2, rtol=5e-2)

    print("KERNEL_OK")
</pallas_src>

<mosaic_0001>
module attributes {stable_mosaic.version = 11 : i64} {
  func.func @_stft_chunk_kernel(%arg0: i32, %arg1: i32, %arg2: memref<1x16x256xf32, #tpu.memory_space<vmem>>, %arg3: memref<256x512xf32, #tpu.memory_space<vmem>>, %arg4: memref<1x16x512xf32, #tpu.memory_space<vmem>>) attributes {dimension_semantics = [#tpu.dimension_semantics<parallel>, #tpu.dimension_semantics<parallel>], iteration_bounds = array<i64: 1, 1>, scalar_prefetch = 0 : i64, scratch_operands = 0 : i64, tpu.core_type = #tpu.core_type<tc>, window_params = [{transform_indices = @transform_0, window_bounds = array<i64: 1, 16, 256>}, {pipeline_mode = #tpu.pipeline_mode<synchronous>, transform_indices = @transform_1, window_bounds = array<i64: 256, 512>}, {transform_indices = @transform_2, window_bounds = array<i64: 1, 16, 512>}]} {
    %c0 = arith.constant 0 : index
    %c0_0 = arith.constant 0 : index
    %c0_1 = arith.constant 0 : index
    %0 = vector.load %arg2[%c0, %c0_0, %c0_1] : memref<1x16x256xf32, #tpu.memory_space<vmem>>, vector<1x16x256xf32>
    %1 = vector.shape_cast %0 : vector<1x16x256xf32> to vector<16x256xf32>
    %c0_2 = arith.constant 0 : index
    %c0_3 = arith.constant 0 : index
    %2 = vector.load %arg3[%c0_2, %c0_3] : memref<256x512xf32, #tpu.memory_space<vmem>>, vector<256x512xf32>
    %cst = arith.constant dense<0.000000e+00> : vector<16x512xf32>
    %3 = tpu.matmul %1, %2, %cst {dimension_numbers = #tpu.dot_dimension_numbers<[1], [0], [0], [1], [0, 0, 1, 1], [], []>} : vector<16x256xf32>, vector<256x512xf32>, vector<16x512xf32> -> vector<16x512xf32>
    %c0_4 = arith.constant 0 : index
    %c0_5 = arith.constant 0 : index
    %c0_6 = arith.constant 0 : index
    %4 = vector.load %arg4[%c0_4, %c0_5, %c0_6] : memref<1x16x512xf32, #tpu.memory_space<vmem>>, vector<1x16x512xf32>
    %5 = vector.shape_cast %4 : vector<1x16x512xf32> to vector<16x512xf32>
    %6 = vector.shape_cast %3 : vector<16x512xf32> to vector<1x16x512xf32>
    tpu.vector_store %arg4[%c0_4, %c0_5, %c0_6], %6 {strides = array<i32>} : memref<1x16x512xf32, #tpu.memory_space<vmem>>, vector<1x16x512xf32>,
    return
  }
  func.func @transform_0(%arg0: i32, %arg1: i32) -> (i32, i32, i32) {
    %c0_i32 = arith.constant 0 : i32
    %c0_i32_0 = arith.constant 0 : i32
    return %arg1, %arg0, %c0_i32 : i32, i32, i32
  }
  func.func @transform_1(%arg0: i32, %arg1: i32) -> (i32, i32) {
    %c0_i32 = arith.constant 0 : i32
    %c0_i32_0 = arith.constant 0 : i32
    %c0_i32_1 = arith.constant 0 : i32
    return %c0_i32, %c0_i32_0 : i32, i32
  }
  func.func @transform_2(%arg0: i32, %arg1: i32) -> (i32, i32, i32) {
    %c0_i32 = arith.constant 0 : i32
    %c0_i32_0 = arith.constant 0 : i32
    return %arg1, %arg0, %c0_i32 : i32, i32, i32
  }
}

</mosaic_0001>

<llo_original>
// kernel: tpu_custom_call.1
$region0: #{tpu_custom_call.1}
  #allocation0 [shape = 'u32[]', space=smem, size = 0x4, offset = 0x4, fixed_abs, tag = 'smem constant byte address 0x4 - core index']
  #allocation1 [shape = 'u32[144,128]{1,0:T(1,128)}', space=vmem, size = 0x12000, scoped, tag = 'internal scratch']
  %s0 = inlined_call_operand.hbm [shape: f32[1,16,256], index: 0, kind: input, shape index: {}]
  %s1 = inlined_call_operand.hbm [shape: f32[256,512], index: 1, kind: input, shape index: {}]
  %s2 = inlined_call_operand.hbm [shape: f32[1,16,512], index: 2, kind: output, shape index: {}]
  %s3 = sld [smem:[#allocation0]]
  $region26: #{tpu_custom_call.1} parent=0
    _
  %s5 = ssub.s32 1, %s3
  %s6 = scalar_select 0, %s5, %s3
  $region1: #{tpu_custom_call.1} parent=0
    #allocation2 [shape = 'u8[16384]{0}', space=vmem, size = 0x4000, scoped, tag = 'input window, operand 0, single buffered']
    #allocation3 [shape = 's32[1]{0}', space=sflag, size = 0x4, scoped, tag = 'scoped memory for tpu_custom_call.1']
    #allocation4 [shape = 's32[1]{0}', space=sflag, size = 0x4, scoped, tag = 'scoped memory for tpu_custom_call.1']
    #allocation5 [shape = 'u8[524288]{0}', space=vmem, size = 0x80000, scoped, tag = 'input window, operand 1, single buffered']
    #allocation6 [shape = 's32[1]{0}', space=sflag, size = 0x4, scoped, tag = 'scoped memory for tpu_custom_call.1']
    #allocation7 [shape = 'u8[32768]{0}', space=vmem, size = 0x8000, scoped, tag = 'output window, operand 0, single buffered']
    %7 = vsyncpa [#allocation3], 0
    %8 = vsyncpa [#allocation6], 0
    %9 = vsyncpa [#allocation4], 0
    // Predicated region
    $region2: #{tpu_custom_call.1} parent=1 // pred_check
      _
    $region3: #{tpu_custom_call.1} parent=1 // pred_check_branch
      %11 = sbr.rel (0) target = $region5
    $region4: #{tpu_custom_call.1} parent=1 // pred_region
      %s13 = ssub.s32 512, 512
      %14 = vsyncadd [#allocation3], %s13
      %s15 = sshll.u32 [#allocation2], 4
      %s16 = int_to_ptr.vmem [resolvable:$true] %s15
      %21 = dma.hbm_to_vmem [thread:$0]  %s0, 512, %s16, [#allocation3], 256, 256, 16
    $region5: #{tpu_custom_call.1} parent=1 // pred_fallthru
      _
    // Predicated region
    $region6: #{tpu_custom_call.1} parent=1 // pred_check
      _
    $region7: #{tpu_custom_call.1} parent=1 // pred_check_branch
      %23 = sbr.rel (0) target = $region9
    $region8: #{tpu_custom_call.1} parent=1 // pred_region
      %s25 = ssub.s32 16384, 16384
      %26 = vsyncadd [#allocation6], %s25
      %s27 = sshll.u32 [#allocation5], 4
      %s28 = int_to_ptr.vmem [resolvable:$true] %s27
      %33 = dma.hbm_to_vmem [thread:$0]  %s1, 16384, %s28, [#allocation6], 512, 512, 32
    $region9: #{tpu_custom_call.1} parent=1 // pred_fallthru
      _
    // Predicated region
    $region10: #{tpu_custom_call.1} parent=1 // pred_check
      _
    $region11: #{tpu_custom_call.1} parent=1 // pred_check_branch
      %35 = sbr.rel (0) target = $region13
    $region12: #{tpu_custom_call.1} parent=1 // pred_region
      %36 = dma.done [#allocation3], 512
    $region13: #{tpu_custom_call.1} parent=1 // pred_fallthru
      _
    // Predicated region
    $region14: #{tpu_custom_call.1} parent=1 // pred_check
      _
    $region15: #{tpu_custom_call.1} parent=1 // pred_check_branch
      %38 = sbr.rel (0) target = $region17
    $region16: #{tpu_custom_call.1} parent=1 // pred_region
      %39 = dma.done [#allocation6], 16384
    $region17: #{tpu_custom_call.1} parent=1 // pred_fallthru
      _
    %v40 = vld [vmem:[#allocation2] sm:$0xff]
    %v41 = vld [vmem:[#allocation2 + $0x8] sm:$0xff]
    %v42 = vld [vmem:[#allocation2 + $0x10] sm:$0xff]
    %v43 = vld [vmem:[#allocation2 + $0x18] sm:$0xff]
    %v44 = vld [vmem:[#allocation5] sm:$0xff]
    %v45 = vld [vmem:[#allocation5 + $0x8] sm:$0xff]
    %v46 = vld [vmem:[#allocation5 + $0x10] sm:$0xff]
    %v47 = vld [vmem:[#allocation5 + $0x18] sm:$0xff]
    %v48 = vld [vmem:[#allocation5 + $0x20] sm:$0xff]
    %v49 = vld [vmem:[#allocation5 + $0x28] sm:$0xff]
    %v50 = vld [vmem:[#allocation5 + $0x30] sm:$0xff]
    %v51 = vld [vmem:[#allocation5 + $0x38] sm:$0xff]
    %v52 = vld [vmem:[#allocation5 + $0x40] sm:$0xff]
    %v53 = vld [vmem:[#allocation5 + $0x48] sm:$0xff]
    %v54 = vld [vmem:[#allocation5 + $0x50] sm:$0xff]
    %v55 = vld [vmem:[#allocation5 + $0x58] sm:$0xff]
    %v56 = vld [vmem:[#allocation5 + $0x60] sm:$0xff]
    %v57 = vld [vmem:[#allocation5 + $0x68] sm:$0xff]
    %v58 = vld [vmem:[#allocation5 + $0x70] sm:$0xff]
    %v59 = vld [vmem:[#allocation5 + $0x78] sm:$0xff]
    %v60 = vld [vmem:[#allocation5 + $0x80] sm:$0xff]
    %v61 = vld [vmem:[#allocation5 + $0x88] sm:$0xff]
    %v62 = vld [vmem:[#allocation5 + $0x90] sm:$0xff]
    %v63 = vld [vmem:[#allocation5 + $0x98] sm:$0xff]
    %v64 = vld [vmem:[#allocation5 + $0xa0] sm:$0xff]
    %v65 = vld [vmem:[#allocation5 + $0xa8] sm:$0xff]
    %v66 = vld [vmem:[#allocation5 + $0xb0] sm:$0xff]
    %v67 = vld [vmem:[#allocation5 + $0xb8] sm:$0xff]
    %v68 = vld [vmem:[#allocation5 + $0xc0] sm:$0xff]
    %v69 = vld [vmem:[#allocation5 + $0xc8] sm:$0xff]
    %v70 = vld [vmem:[#allocation5 + $0xd0] sm:$0xff]
    %v71 = vld [vmem:[#allocation5 + $0xd8] sm:$0xff]
    %v72 = vld [vmem:[#allocation5 + $0xe0] sm:$0xff]
    %v73 = vld [vmem:[#allocation5 + $0xe8] sm:$0xff]
    %v74 = vld [vmem:[#allocation5 + $0xf0] sm:$0xff]
    %v75 = vld [vmem:[#allocation5 + $0xf8] sm:$0xff]
    %v76 = vld [vmem:[#allocation5 + $0x100] sm:$0xff]
    %v77 = vld [vmem:[#allocation5 + $0x108] sm:$0xff]
    %v78 = vld [vmem:[#allocation5 + $0x110] sm:$0xff]
    %v79 = vld [vmem:[#allocation5 + $0x118] sm:$0xff]
    %v80 = vld [vmem:[#allocation5 + $0x120] sm:$0xff]
    %v81 = vld [vmem:[#allocation5 + $0x128] sm:$0xff]
    %v82 = vld [vmem:[#allocation5 + $0x130] sm:$0xff]
    %v83 = vld [vmem:[#allocation5 + $0x138] sm:$0xff]
    %v84 = vld [vmem:[#allocation5 + $0x140] sm:$0xff]
    %v85 = vld [vmem:[#allocation5 + $0x148] sm:$0xff]
    %v86 = vld [vmem:[#allocation5 + $0x150] sm:$0xff]
    %v87 = vld [vmem:[#allocation5 + $0x158] sm:$0xff]
    %v88 = vld [vmem:[#allocation5 + $0x160] sm:$0xff]
    %v89 = vld [vmem:[#allocation5 + $0x168] sm:$0xff]
    %v90 = vld [vmem:[#allocation5 + $0x170] sm:$0xff]
    %v91 = vld [vmem:[#allocation5 + $0x178] sm:$0xff]
    %v92 = vld [vmem:[#allocation5 + $0x180] sm:$0xff]
    %v93 = vld [vmem:[#allocation5 + $0x188] sm:$0xff]
    %v94 = vld [vmem:[#allocation5 + $0x190] sm:$0xff]
    %v95 = vld [vmem:[#allocation5 + $0x198] sm:$0xff]
    %v96 = vld [vmem:[#allocation5 + $0x1a0] sm:$0xff]
    %v97 = vld [vmem:[#allocation5 + $0x1a8] sm:$0xff]
    %v98 = vld [vmem:[#allocation5 + $0x1b0] sm:$0xff]
    %v99 = vld [vmem:[#allocation5 + $0x1b8] sm:$0xff]
    %v100 = vld [vmem:[#allocation5 + $0x1c0] sm:$0xff]
    %v101 = vld [vmem:[#allocation5 + $0x1c8] sm:$0xff]
    %v102 = vld [vmem:[#allocation5 + $0x1d0] sm:$0xff]
    %v103 = vld [vmem:[#allocation5 + $0x1d8] sm:$0xff]
    %v104 = vld [vmem:[#allocation5 + $0x1e0] sm:$0xff]
    %v105 = vld [vmem:[#allocation5 + $0x1e8] sm:$0xff]
    %v106 = vld [vmem:[#allocation5 + $0x1f0] sm:$0xff]
    %v107 = vld [vmem:[#allocation5 + $0x1f8] sm:$0xff]
    %v108 = vld [vmem:[#allocation5 + $0x200] sm:$0xff]
    %v109 = vld [vmem:[#allocation5 + $0x208] sm:$0xff]
    %v110 = vld [vmem:[#allocation5 + $0x210] sm:$0xff]
    %v111 = vld [vmem:[#allocation5 + $0x218] sm:$0xff]
    %v112 = vld [vmem:[#allocation5 + $0x220] sm:$0xff]
    %v113 = vld [vmem:[#allocation5 + $0x228] sm:$0xff]
    %v114 = vld [vmem:[#allocation5 + $0x230] sm:$0xff]
    %v115 = vld [vmem:[#allocation5 + $0x238] sm:$0xff]
    %v116 = vld [vmem:[#allocation5 + $0x240] sm:$0xff]
    %v117 = vld [vmem:[#allocation5 + $0x248] sm:$0xff]
    %v118 = vld [vmem:[#allocation5 + $0x250] sm:$0xff]
    %v119 = vld [vmem:[#allocation5 + $0x258] sm:$0xff]
    %v120 = vld [vmem:[#allocation5 + $0x260] sm:$0xff]
    %v121 = vld [vmem:[#allocation5 + $0x268] sm:$0xff]
    %v122 = vld [vmem:[#allocation5 + $0x270] sm:$0xff]
    %v123 = vld [vmem:[#allocation5 + $0x278] sm:$0xff]
    %v124 = vld [vmem:[#allocation5 + $0x280] sm:$0xff]
    %v125 = vld [vmem:[#allocation5 + $0x288] sm:$0xff]
    %v126 = vld [vmem:[#allocation5 + $0x290] sm:$0xff]
    %v127 = vld [vmem:[#allocation5 + $0x298] sm:$0xff]
    %v128 = vld [vmem:[#allocation5 + $0x2a0] sm:$0xff]
    %v129 = vld [vmem:[#allocation5 + $0x2a8] sm:$0xff]
    %v130 = vld [vmem:[#allocation5 + $0x2b0] sm:$0xff]
    %v131 = vld [vmem:[#allocation5 + $0x2b8] sm:$0xff]
    %v132 = vld [vmem:[#allocation5 + $0x2c0] sm:$0xff]
    %v133 = vld [vmem:[#allocation5 + $0x2c8] sm:$0xff]
    %v134 = vld [vmem:[#allocation5 + $0x2d0] sm:$0xff]
    %v135 = vld [vmem:[#allocation5 + $0x2d8] sm:$0xff]
    %v136 = vld [vmem:[#allocation5 + $0x2e0] sm:$0xff]
    %v137 = vld [vmem:[#allocation5 + $0x2e8] sm:$0xff]
    %v138 = vld [vmem:[#allocation5 + $0x2f0] sm:$0xff]
    %v139 = vld [vmem:[#allocation5 + $0x2f8] sm:$0xff]
    %v140 = vld [vmem:[#allocation5 + $0x300] sm:$0xff]
    %v141 = vld [vmem:[#allocation5 + $0x308] sm:$0xff]
    %v142 = vld [vmem:[#allocation5 + $0x310] sm:$0xff]
    %v143 = vld [vmem:[#allocation5 + $0x318] sm:$0xff]
    %v144 = vld [vmem:[#allocation5 + $0x320] sm:$0xff]
    %v145 = vld [vmem:[#allocation5 + $0x328] sm:$0xff]
    %v146 = vld [vmem:[#allocation5 + $0x330] sm:$0xff]
    %v147 = vld [vmem:[#allocation5 + $0x338] sm:$0xff]
    %v148 = vld [vmem:[#allocation5 + $0x340] sm:$0xff]
    %v149 = vld [vmem:[#allocation5 + $0x348] sm:$0xff]
    %v150 = vld [vmem:[#allocation5 + $0x350] sm:$0xff]
    %v151 = vld [vmem:[#allocation5 + $0x358] sm:$0xff]
    %v152 = vld [vmem:[#allocation5 + $0x360] sm:$0xff]
    %v153 = vld [vmem:[#allocation5 + $0x368] sm:$0xff]
    %v154 = vld [vmem:[#allocation5 + $0x370] sm:$0xff]
    %v155 = vld [vmem:[#allocation5 + $0x378] sm:$0xff]
    %v156 = vld [vmem:[#allocation5 + $0x380] sm:$0xff]
    %v157 = vld [vmem:[#allocation5 + $0x388] sm:$0xff]
    %v158 = vld [vmem:[#allocation5 + $0x390] sm:$0xff]
    %v159 = vld [vmem:[#allocation5 + $0x398] sm:$0xff]
    %v160 = vld [vmem:[#allocation5 + $0x3a0] sm:$0xff]
    %v161 = vld [vmem:[#allocation5 + $0x3a8] sm:$0xff]
    %v162 = vld [vmem:[#allocation5 + $0x3b0] sm:$0xff]
    %v163 = vld [vmem:[#allocation5 + $0x3b8] sm:$0xff]
    %v164 = vld [vmem:[#allocation5 + $0x3c0] sm:$0xff]
    %v165 = vld [vmem:[#allocation5 + $0x3c8] sm:$0xff]
    %v166 = vld [vmem:[#allocation5 + $0x3d0] sm:$0xff]
    %v167 = vld [vmem:[#allocation5 + $0x3d8] sm:$0xff]
    %v168 = vld [vmem:[#allocation5 + $0x3e0] sm:$0xff]
    %v169 = vld [vmem:[#allocation5 + $0x3e8] sm:$0xff]
    %v170 = vld [vmem:[#allocation5 + $0x3f0] sm:$0xff]
    %v171 = vld [vmem:[#allocation5 + $0x3f8] sm:$0xff]
    %172 = vmatprep.subr.mxu0 %v45
    %173 = vmatpush1.msra.mxu0 %v44
    %174 = vmatprep.subr.mxu0 %v49
    %175 = vmatpush1.msra.mxu0 %v48
    %176 = vmatprep.subr.mxu0 %v53
    %177 = vmatpush1.msra.mxu0 %v52
    %178 = vmatprep.subr.mxu0 %v57
    %179 = vmatpush1.msra.mxu0 %v56
    %180 = vmatprep.subr.mxu0 %v61
    %181 = vmatpush1.msra.mxu0 %v60
    %182 = vmatprep.subr.mxu0 %v65
    %183 = vmatpush1.msra.mxu0 %v64
    %184 = vmatprep.subr.mxu0 %v69
    %185 = vmatpush1.msra.mxu0 %v68
    %186 = vmatprep.subr.mxu0 %v73
    %187 = vmatpush1.msra.mxu0 %v72
    %188 = vmatprep.subr.mxu0 %v77
    %189 = vmatpush1.msra.mxu0 %v76
    %190 = vmatprep.subr.mxu0 %v81
    %191 = vmatpush1.msra.mxu0 %v80
    %192 = vmatprep.subr.mxu0 %v85
    %193 = vmatpush1.msra.mxu0 %v84
    %194 = vmatprep.subr.mxu0 %v89
    %195 = vmatpush1.msra.mxu0 %v88
    %196 = vmatprep.subr.mxu0 %v93
    %197 = vmatpush1.msra.mxu0 %v92
    %198 = vmatprep.subr.mxu0 %v97
    %199 = vmatpush1.msra.mxu0 %v96
    %200 = vmatprep.subr.mxu0 %v101
    %201 = vmatpush1.msra.mxu0 %v100
    %202 = vmatprep.subr.mxu0 %v105
    %203 = vmatpush1.msra.mxu0 %v104
    %204 = vmatprep.subr.mxu0 %v109
    %205 = vmatpush1.msra.mxu0 %v108
    %206 = vmatprep.subr.mxu0 %v113
    %207 = vmatpush1.msra.mxu0 %v112
    %208 = vmatprep.subr.mxu0 %v117
    %209 = vmatpush1.msra.mxu0 %v116
    %210 = vmatprep.subr.mxu0 %v121
    %211 = vmatpush1.msra.mxu0 %v120
    %212 = vmatprep.subr.mxu0 %v125
    %213 = vmatpush1.msra.mxu0 %v124
    %214 = vmatprep.subr.mxu0 %v129
    %215 = vmatpush1.msra.mxu0 %v128
    %216 = vmatprep.subr.mxu0 %v133
    %217 = vmatpush1.msra.mxu0 %v132
    %218 = vmatprep.subr.mxu0 %v137
    %219 = vmatpush1.msra.mxu0 %v136
    %220 = vmatprep.subr.mxu0 %v141
    %221 = vmatpush1.msra.mxu0 %v140
    %222 = vmatprep.subr.mxu0 %v145
    %223 = vmatpush1.msra.mxu0 %v144
    %224 = vmatprep.subr.mxu0 %v149
    %225 = vmatpush1.msra.mxu0 %v148
    %226 = vmatprep.subr.mxu0 %v153
    %227 = vmatpush1.msra.mxu0 %v152
    %228 = vmatprep.subr.mxu0 %v157
    %229 = vmatpush1.msra.mxu0 %v156
    %230 = vmatprep.subr.mxu0 %v161
    %231 = vmatpush1.msra.mxu0 %v160
    %232 = vmatprep.subr.mxu0 %v165
    %233 = vmatpush1.msra.mxu0 %v164
    %234 = vmatprep.subr.mxu0 %v169
    %235 = vmatpush1.msra.mxu0 %v168
    %236 = vmatprep.mubr.f32.mxu0 %v41
    %237 = vmatmul.mubr.f32.gmra.mrb[0].mxu0 %v40
    %v238 = vpop.f32.mrb[0].mxu0
    %v239 = vadd.f32 0.0, %v238
    %v240 = vpop.f32.mrb[0].mxu0
    %v241 = vadd.f32 0.0, %v240
    %242 = vmatprep.mubr.f32.mxu0 %v43
    %243 = vmatmul.mubr.f32.gmra.mrb[0].mxu0 %v42
    %v244 = vpop.f32.mrb[0].mxu0
    %v245 = vadd.f32 0.0, %v244
    %v246 = vpop.f32.mrb[0].mxu0
    %v247 = vadd.f32 0.0, %v246
    %248 = vdwg.mxu0
    %249 = vmatprep.subr.mxu0 %v47
    %250 = vmatpush1.msra.mxu0 %v46
    %251 = vmatprep.subr.mxu0 %v51
    %252 = vmatpush1.msra.mxu0 %v50
    %253 = vmatprep.subr.mxu0 %v55
    %254 = vmatpush1.msra.mxu0 %v54
    %255 = vmatprep.subr.mxu0 %v59
    %256 = vmatpush1.msra.mxu0 %v58
    %257 = vmatprep.subr.mxu0 %v63
    %258 = vmatpush1.msra.mxu0 %v62
    %259 = vmatprep.subr.mxu0 %v67
    %260 = vmatpush1.msra.mxu0 %v66
    %261 = vmatprep.subr.mxu0 %v71
    %262 = vmatpush1.msra.mxu0 %v70
    %263 = vmatprep.subr.mxu0 %v75
    %264 = vmatpush1.msra.mxu0 %v74
    %265 = vmatprep.subr.mxu0 %v79
    %266 = vmatpush1.msra.mxu0 %v78
    %267 = vmatprep.subr.mxu0 %v83
    %268 = vmatpush1.msra.mxu0 %v82
    %269 = vmatprep.subr.mxu0 %v87
    %270 = vmatpush1.msra.mxu0 %v86
    %271 = vmatprep.subr.mxu0 %v91
    %272 = vmatpush1.msra.mxu0 %v90
    %273 = vmatprep.subr.mxu0 %v95
    %274 = vmatpush1.msra.mxu0 %v94
    %275 = vmatprep.subr.mxu0 %v99
    %276 = vmatpush1.msra.mxu0 %v98
    %277 = vmatprep.subr.mxu0 %v103
    %278 = vmatpush1.msra.mxu0 %v102
    %279 = vmatprep.subr.mxu0 %v107
    %280 = vmatpush1.msra.mxu0 %v106
    %281 = vmatprep.subr.mxu0 %v111
    %282 = vmatpush1.msra.mxu0 %v110
    %283 = vmatprep.subr.mxu0 %v115
    %284 = vmatpush1.msra.mxu0 %v114
    %285 = vmatprep.subr.mxu0 %v119
    %286 = vmatpush1.msra.mxu0 %v118
    %287 = vmatprep.subr.mxu0 %v123
    %288 = vmatpush1.msra.mxu0 %v122
    %289 = vmatprep.subr.mxu0 %v127
    %290 = vmatpush1.msra.mxu0 %v126
    %291 = vmatprep.subr.mxu0 %v131
    %292 = vmatpush1.msra.mxu0 %v130
    %293 = vmatprep.subr.mxu0 %v135
    %294 = vmatpush1.msra.mxu0 %v134
    %295 = vmatprep.subr.mxu0 %v139
    %296 = vmatpush1.msra.mxu0 %v138
    %297 = vmatprep.subr.mxu0 %v143
    %298 = vmatpush1.msra.mxu0 %v142
    %299 = vmatprep.subr.mxu0 %v147
    %300 = vmatpush1.msra.mxu0 %v146
    %301 = vmatprep.subr.mxu0 %v151
    %302 = vmatpush1.msra.mxu0 %v150
    %303 = vmatprep.subr.mxu0 %v155
    %304 = vmatpush1.msra.mxu0 %v154
    %305 = vmatprep.subr.mxu0 %v159
    %306 = vmatpush1.msra.mxu0 %v158
    %307 = vmatprep.subr.mxu0 %v163
    %308 = vmatpush1.msra.mxu0 %v162
    %309 = vmatprep.subr.mxu0 %v167
    %310 = vmatpush1.msra.mxu0 %v166
    %311 = vmatprep.subr.mxu0 %v171
    %312 = vmatpush1.msra.mxu0 %v170
    %313 = vmatprep.mubr.f32.mxu0 %v41
    %314 = vmatmul.mubr.f32.gmra.mrb[0].mxu0 %v40
    %v315 = vpop.f32.mrb[0].mxu0
    %v316 = vadd.f32 0.0, %v315
    %v317 = vpop.f32.mrb[0].mxu0
    %v318 = vadd.f32 0.0, %v317
    %319 = vmatprep.mubr.f32.mxu0 %v43
    %320 = vmatmul.mubr.f32.gmra.mrb[0].mxu0 %v42
    %v321 = vpop.f32.mrb[0].mxu0
    %v322 = vadd.f32 0.0, %v321
    %v323 = vpop.f32.mrb[0].mxu0
    %v324 = vadd.f32 0.0, %v323
    %325 = vdwg.mxu0
    %326 = vst [vmem:[#allocation7] sm:$0xff] %v239
    %327 = vst [vmem:[#allocation7 + $0x8] sm:$0xff] %v241
    %328 = vst [vmem:[#allocation7 + $0x10] sm:$0xff] %v316
    %329 = vst [vmem:[#allocation7 + $0x18] sm:$0xff] %v318
    %330 = vst [vmem:[#allocation7 + $0x20] sm:$0xff] %v245
    %331 = vst [vmem:[#allocation7 + $0x28] sm:$0xff] %v247
    %332 = vst [vmem:[#allocation7 + $0x30] sm:$0xff] %v322
    %333 = vst [vmem:[#allocation7 + $0x38] sm:$0xff] %v324
    // Predicated region
    $region18: #{tpu_custom_call.1} parent=1 // pred_check
      _
    $region19: #{tpu_custom_call.1} parent=1 // pred_check_branch
      %335 = sbr.rel (0) target = $region21
    $region20: #{tpu_custom_call.1} parent=1 // pred_region
      %s337 = ssub.s32 1024, 1024
      %338 = vsyncadd [#allocation4], %s337
      %s339 = sshll.u32 [#allocation7], 4
      %s340 = int_to_ptr.vmem [resolvable:$true] %s339
      %345 = dma.vmem_to_hbm [thread:$0]  %s340, 1024, %s2, [#allocation4], 512, 512, 32
    $region21: #{tpu_custom_call.1} parent=1 // pred_fallthru
      _
    // Predicated region
    $region22: #{tpu_custom_call.1} parent=1 // pred_check
      _
    $region23: #{tpu_custom_call.1} parent=1 // pred_check_branch
      %347 = sbr.rel (0) target = $region25
    $region24: #{tpu_custom_call.1} parent=1 // pred_region
      %348 = dma.done [#allocation4], 1024
    $region25: #{tpu_custom_call.1} parent=1 // pred_fallthru
      _
    %349 = vsyncpa [#allocation3], 1
    %350 = vsyncpa [#allocation6], 1
    %351 = vsyncpa [#allocation4], 1

</llo_original>
